<compile_context>
chip_gen: v5e
topology: v5e:2x2
jax: 0.10.0
libtpu: 0.0.40
codegen_flags: <defaults>
</compile_context>

<pallas_src>
import numpy as np
import jax
import jax.numpy as jnp
from jax.experimental import pallas as pl
from jax.experimental.pallas import tpu as pltpu


def make_positional_encoding(max_seq_len, embedding_dim):
    """Same table as the torch double loop: sin on even dims, cos on odd dims."""
    pos = np.arange(max_seq_len, dtype=np.float64)[:, None]          # (L, 1)
    i = np.arange(embedding_dim, dtype=np.float64)[None, :]          # (1, D)
    exponent = (i - (i % 2)) / float(embedding_dim)                  # i (even) / i-1 (odd)
    angle = pos / np.power(10000.0, exponent)                        # (L, D)
    even_mask = (np.arange(embedding_dim) % 2 == 0)[None, :]
    pe = np.where(even_mask, np.sin(angle), np.cos(angle))
    return jnp.asarray(pe, dtype=jnp.float32)


def pos_enc_kernel(x_ref, cls_pe0_ref, pe_ref, o_ref):
    # x_ref:       (Bt, S, D)   batch-block of the input
    # cls_pe0_ref: (1, D)       precomputed cls_token + pe[0]  (batch-invariant)
    # pe_ref:      (S, D)       positional-encoding rows 1..S  (batch-invariant)
    # o_ref:       (Bt, S+1, D) output batch-block
    bt = o_ref.shape[0]
    d = o_ref.shape[2]
    # cls row (position 0) — broadcast the precomputed row across the batch block.
    o_ref[:, 0:1, :] = jnp.broadcast_to(cls_pe0_ref[...][None], (bt, 1, d))
    # body rows (positions 1..S) — x + pe, pe broadcast over the batch block.
    o_ref[:, 1:, :] = x_ref[...] + pe_ref[...][None]


def _pick_batch_block(B, S, D, itemsize, target_bytes=2 << 20, min_steps=2):
    """Largest Bt dividing B s.t. the output block is ~target_bytes and the
    grid has >= min_steps steps (so v7x's 2 TensorCores both get work)."""
    per_b = (S + 1) * D * itemsize
    bt = max(1, target_bytes // per_b)
    if B >= min_steps:
        bt = min(bt, B // min_steps)       # keep >= 2 grid steps
    bt = max(1, min(bt, B))
    while B % bt != 0:                     # avoid partial edge blocks
        bt -= 1
    return bt


def make_positional_encoding_forward(cls_token, pe, seq_len):
    """Build a jitted forward for a fixed (static) seq_len.

    cls_token: (1, 1, D); pe: (max_seq_len, D).
    Precomputes the batch-invariant pieces once (outside the jitted call):
      cls_pe0 = cls_token + pe[0]   and   pe_rest = pe[1:seq_len+1].
    """
    D = cls_token.shape[-1]
    assert seq_len + 1 <= pe.shape[0], "sequence longer than max_seq_len"
    cls_pe0 = (cls_token.reshape(1, D) + pe[0:1, :]).astype(pe.dtype)   # (1, D)
    pe_rest = pe[1:seq_len + 1, :]                                      # (S, D)

    def forward(x):
        B, S, Dx = x.shape
        assert S == seq_len and Dx == D
        Bt = _pick_batch_block(B, S, D, x.dtype.itemsize)
        grid = (B // Bt,)
        return pl.pallas_call(
            pos_enc_kernel,
            out_shape=jax.ShapeDtypeStruct((B, S + 1, D), x.dtype),
            grid=grid,
            in_specs=[
                pl.BlockSpec((Bt, S, D), lambda b: (b, 0, 0)),
                pl.BlockSpec((1, D), lambda b: (0, 0)),   # resident in VMEM
                pl.BlockSpec((S, D), lambda b: (0, 0)),   # resident in VMEM
            ],
            out_specs=pl.BlockSpec((Bt, S + 1, D), lambda b: (b, 0, 0)),
            compiler_params=pltpu.CompilerParams(
                dimension_semantics=("parallel",)),
        )(x, cls_pe0.astype(x.dtype), pe_rest.astype(x.dtype))

    return jax.jit(forward)


if __name__ == "__main__":
    key = jax.random.PRNGKey(0)
    k_cls, k_x = jax.random.split(key)

    # Small, module-consistent shapes: batch=2, seq=8, embedding_dim=128
    # (D multiple of 128 keeps the lane axis dense), max_seq_len=64 >= seq+1.
    B, S, D = 2, 8, 128
    max_seq_len = 64

    cls_token = jax.random.normal(k_cls, (1, 1, D), jnp.float32)   # nn.Parameter
    pe = make_positional_encoding(max_seq_len, D)                  # registered buffer
    x = jax.random.normal(k_x, (B, S, D), jnp.float32)

    forward = make_positional_encoding_forward(cls_token, pe, seq_len=S)
    out = forward(x)
    jax.block_until_ready(out)
    assert out.shape == (B, S + 1, D) and out.dtype == jnp.float32

    # Pure-JAX reference (concat cls token, add pe[:S+1]).
    ref = jnp.concatenate(
        [jnp.broadcast_to(cls_token, (B, 1, D)), x], axis=1) + pe[:S + 1][None]
    np.testing.assert_allclose(np.asarray(out), np.asarray(ref),
                               rtol=1e-6, atol=1e-6)

    print("KERNEL_OK")
</pallas_src>

<mosaic_0001>
module attributes {stable_mosaic.version = 11 : i64} {
  func.func @pos_enc_kernel(%arg0: i32, %arg1: memref<1x8x128xf32, #tpu.memory_space<vmem>>, %arg2: memref<1x128xf32, #tpu.memory_space<vmem>>, %arg3: memref<8x128xf32, #tpu.memory_space<vmem>>, %arg4: memref<1x9x128xf32, #tpu.memory_space<vmem>>) attributes {dimension_semantics = [#tpu.dimension_semantics<parallel>], iteration_bounds = array<i64: 2>, scalar_prefetch = 0 : i64, scratch_operands = 0 : i64, tpu.core_type = #tpu.core_type<tc>, window_params = [{transform_indices = @transform_0, window_bounds = array<i64: 1, 8, 128>}, {pipeline_mode = #tpu.pipeline_mode<synchronous>, transform_indices = @transform_1, window_bounds = array<i64: 1, 128>}, {pipeline_mode = #tpu.pipeline_mode<synchronous>, transform_indices = @transform_2, window_bounds = array<i64: 8, 128>}, {transform_indices = @transform_3, window_bounds = array<i64: 1, 9, 128>}]} {
    %c0 = arith.constant 0 : index
    %c0_0 = arith.constant 0 : index
    %0 = vector.load %arg2[%c0, %c0_0] : memref<1x128xf32, #tpu.memory_space<vmem>>, vector<1x128xf32>
    %1 = vector.shape_cast %0 : vector<1x128xf32> to vector<1x1x128xf32>
    %c0_1 = arith.constant 0 : index
    %c0_2 = arith.constant 0 : index
    %c0_3 = arith.constant 0 : index
    %2 = vector.load %arg4[%c0_1, %c0_2, %c0_3] : memref<1x9x128xf32, #tpu.memory_space<vmem>>, vector<1x1x128xf32>
    tpu.vector_store %arg4[%c0_1, %c0_2, %c0_3], %1 {strides = array<i32>} : memref<1x9x128xf32, #tpu.memory_space<vmem>>, vector<1x1x128xf32>,
    %c0_4 = arith.constant 0 : index
    %c0_5 = arith.constant 0 : index
    %c0_6 = arith.constant 0 : index
    %3 = vector.load %arg1[%c0_4, %c0_5, %c0_6] : memref<1x8x128xf32, #tpu.memory_space<vmem>>, vector<1x8x128xf32>
    %c0_7 = arith.constant 0 : index
    %c0_8 = arith.constant 0 : index
    %4 = vector.load %arg3[%c0_7, %c0_8] : memref<8x128xf32, #tpu.memory_space<vmem>>, vector<8x128xf32>
    %5 = vector.shape_cast %4 : vector<8x128xf32> to vector<1x8x128xf32>
    %6 = arith.addf %3, %5 : vector<1x8x128xf32>
    %c0_9 = arith.constant 0 : index
    %c1 = arith.constant 1 : index
    %c0_10 = arith.constant 0 : index
    %7 = vector.load %arg4[%c0_9, %c1, %c0_10] : memref<1x9x128xf32, #tpu.memory_space<vmem>>, vector<1x8x128xf32>
    tpu.vector_store %arg4[%c0_9, %c1, %c0_10], %6 {strides = array<i32>} : memref<1x9x128xf32, #tpu.memory_space<vmem>>, vector<1x8x128xf32>,
    return
  }
  func.func @transform_0(%arg0: i32) -> (i32, i32, i32) {
    %c0_i32 = arith.constant 0 : i32
    %c0_i32_0 = arith.constant 0 : i32
    %c0_i32_1 = arith.constant 0 : i32
    return %arg0, %c0_i32, %c0_i32_0 : i32, i32, i32
  }
  func.func @transform_1(%arg0: i32) -> (i32, i32) {
    %c0_i32 = arith.constant 0 : i32
    %c0_i32_0 = arith.constant 0 : i32
    %c0_i32_1 = arith.constant 0 : i32
    return %c0_i32, %c0_i32_0 : i32, i32
  }
  func.func @transform_2(%arg0: i32) -> (i32, i32) {
    %c0_i32 = arith.constant 0 : i32
    %c0_i32_0 = arith.constant 0 : i32
    %c0_i32_1 = arith.constant 0 : i32
    return %c0_i32, %c0_i32_0 : i32, i32
  }
  func.func @transform_3(%arg0: i32) -> (i32, i32, i32) {
    %c0_i32 = arith.constant 0 : i32
    %c0_i32_0 = arith.constant 0 : i32
    %c0_i32_1 = arith.constant 0 : i32
    return %arg0, %c0_i32, %c0_i32_0 : i32, i32, i32
  }
}

</mosaic_0001>

<llo_original>
// kernel: forward.1
$region0: #{forward.1}
  #allocation0 [shape = 'u32[]', space=smem, size = 0x4, offset = 0x4, fixed_abs, tag = 'smem constant byte address 0x4 - core index']
  #allocation1 [shape = 'u32[72,128]{1,0:T(1,128)}', space=vmem, size = 0x9000, scoped, tag = 'internal scratch']
  %s0 = inlined_call_operand.hbm [shape: f32[2,8,128], index: 0, kind: input, shape index: {}]
  %s1 = inlined_call_operand.hbm [shape: f32[1,128], index: 1, kind: input, shape index: {}]
  %s2 = inlined_call_operand.hbm [shape: f32[8,128], index: 2, kind: input, shape index: {}]
  %s3 = inlined_call_operand.vmem [shape: f32[2,9,128], index: 3, kind: output, shape index: {}]
  %s4 = sld [smem:[#allocation0]]
  $region57: #{forward.1} parent=0
    _
  %s6 = ssub.s32 1, %s4
  %s7 = scalar_select 0, %s6, %s4
  $region1: #{forward.1} parent=0
    #allocation2 [shape = 'u8[8192]{0}', space=vmem, size = 0x2000, scoped, tag = 'input window, operand 0']
    #allocation3 [shape = 's32[2]{0}', space=sflag, size = 0x8, scoped, tag = 'scoped memory for forward.1']
    #allocation4 [shape = 'u8[512]{0}', space=vmem, size = 0x400, scoped, tag = 'input window, operand 1, single buffered']
    #allocation5 [shape = 's32[1]{0}', space=sflag, size = 0x4, scoped, tag = 'scoped memory for forward.1']
    #allocation6 [shape = 'u8[4096]{0}', space=vmem, size = 0x1000, scoped, tag = 'input window, operand 2, single buffered']
    %8 = vsyncpa [#allocation3], 0
    %s9 = scalar_lea.sflag [#allocation3], 1
    %10 = vsyncpa %s9, 0
    %11 = vsyncpa [#allocation5], 0
    loop: start=0, step=1, limit=4
    $region2: #{forward.1} parent=1 // loop_pre_header
      _
    $region3: #{forward.1} parent=1 // loop_header
      %s13 = sphi 0, %s17
      %p14 = scmp.ge.s32.totalorder %s13, 4
      %s23 = sphi 0, %s25
      %s26 = sphi 0, %s23
      %s27 = sphi 0, %s26
      %s43 = sphi 0, %s27
      %s47 = sphi 0, %s47
      %s49 = sphi 0, %s47
      %s50 = sphi 0, %s49
      %s64 = sphi 0, %s50
      %s68 = sphi 0, %s68
      %s70 = sphi 0, %s68
      %s71 = sphi 0, %s70
      %s85 = sphi 0, %s71
      %s91 = sphi 0, %s93
      %s94 = sphi 0, %s91
      %s95 = sphi 0, %s94
      %s111 = sphi 0, %s95
    $region4: #{forward.1} parent=1 // loop_header_branch
      %16 = sbr.rel (%p14) target = $region8
    $region5: #{forward.1} parent=1 // loop_body
      %s18 = ssub.s32 %s13, 1
      %s19 = ssub.s32 %s13, 2
      %s20 = sadd.s32 %s13, 1
      %s21 = ssub.s32 %s13, %s20
      %p22 = scmp.eq.s32.totalorder %s21, 0
      %s24 = sadd.s32 %s23, 1
      %s25 = scalar_select %p22, %s23, %s24
      %p28 = pneg %p22
      %p29 = scmp.eq.s32.totalorder %s13, 1
      %p30 = por %p28, %p29
      %p31 = scmp.ne.s32.totalorder %s23, %s26
      %p32 = scmp.eq.s32.totalorder %s13, 0
      %p33 = por %p31, %p32
      %p34 = scmp.ne.s32.totalorder %s23, %s26
      %p35 = scmp.eq.s32.totalorder %s18, 1
      %p36 = por %p34, %p35
      %p37 = scmp.ne.s32.totalorder %s26, %s27
      %p38 = scmp.eq.s32.totalorder %s18, 0
      %p39 = por %p37, %p38
      %p40 = scmp.ne.s32.totalorder %s26, %s27
      %p41 = scmp.eq.s32.totalorder %s19, 1
      %p42 = por %p40, %p41
      %p44 = scmp.ne.s32.totalorder %s27, %s43
      %p45 = scmp.eq.s32.totalorder %s19, 0
      %p46 = por %p44, %p45
      %s48 = sadd.s32 %s47, 1
      %p51 = scmp.eq.s32.totalorder %s13, 1
      %p52 = scmp.ne.s32.totalorder %s47, %s49
      %p53 = scmp.eq.s32.totalorder %s13, 0
      %p54 = por %p52, %p53
      %p55 = scmp.ne.s32.totalorder %s47, %s49
      %p56 = scmp.eq.s32.totalorder %s18, 1
      %p57 = por %p55, %p56
      %p58 = scmp.ne.s32.totalorder %s49, %s50
      %p59 = scmp.eq.s32.totalorder %s18, 0
      %p60 = por %p58, %p59
      %p61 = scmp.ne.s32.totalorder %s49, %s50
      %p62 = scmp.eq.s32.totalorder %s19, 1
      %p63 = por %p61, %p62
      %p65 = scmp.ne.s32.totalorder %s50, %s64
      %p66 = scmp.eq.s32.totalorder %s19, 0
      %p67 = por %p65, %p66
      %s69 = sadd.s32 %s68, 1
      %p72 = scmp.eq.s32.totalorder %s13, 1
      %p73 = scmp.ne.s32.totalorder %s68, %s70
      %p74 = scmp.eq.s32.totalorder %s13, 0
      %p75 = por %p73, %p74
      %p76 = scmp.ne.s32.totalorder %s68, %s70
      %p77 = scmp.eq.s32.totalorder %s18, 1
      %p78 = por %p76, %p77
      %p79 = scmp.ne.s32.totalorder %s70, %s71
      %p80 = scmp.eq.s32.totalorder %s18, 0
      %p81 = por %p79, %p80
      %p82 = scmp.ne.s32.totalorder %s70, %s71
      %p83 = scmp.eq.s32.totalorder %s19, 1
      %p84 = por %p82, %p83
      %p86 = scmp.ne.s32.totalorder %s71, %s85
      %p87 = scmp.eq.s32.totalorder %s19, 0
      %p88 = por %p86, %p87
      %s89 = ssub.s32 %s13, %s20
      %p90 = scmp.eq.s32.totalorder %s89, 0
      %s92 = sadd.s32 %s91, 1
      %s93 = scalar_select %p90, %s91, %s92
      %p96 = pneg %p90
      %p97 = scmp.eq.s32.totalorder %s13, 1
      %p98 = por %p96, %p97
      %p99 = scmp.ne.s32.totalorder %s91, %s94
      %p100 = scmp.eq.s32.totalorder %s13, 0
      %p101 = por %p99, %p100
      %p102 = scmp.ne.s32.totalorder %s91, %s94
      %p103 = scmp.eq.s32.totalorder %s18, 1
      %p104 = por %p102, %p103
      %p105 = scmp.ne.s32.totalorder %s94, %s95
      %p106 = scmp.eq.s32.totalorder %s18, 0
      %p107 = por %p105, %p106
      %p108 = scmp.ne.s32.totalorder %s94, %s95
      %p109 = scmp.eq.s32.totalorder %s19, 1
      %p110 = por %p108, %p109
      %p112 = scmp.ne.s32.totalorder %s95, %s111
      %p113 = scmp.eq.s32.totalorder %s19, 0
      %p114 = por %p112, %p113
      %p115 = scmp.le.s32.totalorder 1, %s13
      %p116 = scmp.lt.s32.totalorder %s13, 3
      %p117 = pnand %p115, %p116
      %p118 = pneg %p117
      // Predicated region
      $region9: #{forward.1} parent=5 // pred_check
        _
      $region10: #{forward.1} parent=5 // pred_check_branch
        %120 = sbr.rel (%p117) target = $region12
      $region11: #{forward.1} parent=5 // pred_region
        %s121 = ssub.s32 %s13, 1
        // Predicated region
        $region13: #{forward.1} parent=11 // pred_check
          %p122 = pneg %p60
        $region14: #{forward.1} parent=11 // pred_check_branch
          %124 = sbr.rel (%p122) target = $region16
        $region15: #{forward.1} parent=11 // pred_region
          %126 = vsyncadd [#allocation5], 0
          %s128 = sshll.u32 %s1, 4
          %s129 = int_to_ptr.hbm [resolvable:$true] %s128
          %s130 = sshll.u32 [#allocation4], 4
          %s131 = int_to_ptr.vmem [resolvable:$true] %s130
          %133 = dma.hbm_to_vmem [thread:$0]  %s129, 16, %s131, [#allocation5]
        $region16: #{forward.1} parent=11 // pred_fallthru
          _
        // Predicated region
        $region17: #{forward.1} parent=11 // pred_check
          %p134 = pneg %p81
        $region18: #{forward.1} parent=11 // pred_check_branch
          %136 = sbr.rel (%p134) target = $region20
        $region19: #{forward.1} parent=11 // pred_region
          %138 = vsyncadd [#allocation5], 0
          %s140 = sshll.u32 %s2, 4
          %s141 = int_to_ptr.hbm [resolvable:$true] %s140
          %s142 = sshll.u32 [#allocation6], 4
          %s143 = int_to_ptr.vmem [resolvable:$true] %s142
          %145 = dma.hbm_to_vmem [thread:$0]  %s141, 128, %s143, [#allocation5]
        $region20: #{forward.1} parent=11 // pred_fallthru
          _
      $region12: #{forward.1} parent=5 // pred_fallthru
        _
      %p146 = scmp.lt.s32.totalorder %s13, 2
      // Predicated region
      $region21: #{forward.1} parent=5 // pred_check
        %p147 = pneg %p146
      $region22: #{forward.1} parent=5 // pred_check_branch
        %149 = sbr.rel (%p147) target = $region24
      $region23: #{forward.1} parent=5 // pred_region
        // Predicated region
        $region25: #{forward.1} parent=23 // pred_check
          %p150 = pneg %p33
        $region26: #{forward.1} parent=23 // pred_check_branch
          %152 = sbr.rel (%p150) target = $region28
        $region27: #{forward.1} parent=23 // pred_region
          %s153 = sand.u32 %s23, 1
          %s154 = scalar_lea.sflag [#allocation3], %s153
          %s155 = sand.u32 %s23, 1
          %s156 = smul.addr %s155, 8
          %s157 = scalar_lea.vmem [#allocation2], %s156
          %159 = vsyncadd %s154, 0
          %s160 = smul.addr %s13, 8
          %s161 = scalar_lea.hbm %s0, %s160
          %s163 = sshll.u32 %s161, 4
          %s164 = int_to_ptr.hbm [resolvable:$true] %s163
          %s165 = sshll.u32 %s157, 4
          %s166 = int_to_ptr.vmem [resolvable:$true] %s165
          %168 = dma.hbm_to_vmem [thread:$0]  %s164, 128, %s166, %s154
        $region28: #{forward.1} parent=23 // pred_fallthru
          _
      $region24: #{forward.1} parent=5 // pred_fallthru
        _
      %p169 = scmp.le.s32.totalorder 1, %s13
      %p170 = scmp.lt.s32.totalorder %s13, 3
      %p171 = pnand %p169, %p170
      %p172 = pneg %p171
      // Predicated region
      $region29: #{forward.1} parent=5 // pred_check
        _
      $region30: #{forward.1} parent=5 // pred_check_branch
        %174 = sbr.rel (%p171) target = $region32
      $region31: #{forward.1} parent=5 // pred_region
        %s175 = ssub.s32 %s13, 1
        %s176 = sand.u32 %s26, 1
        %s177 = scalar_lea.sflag [#allocation3], %s176
        %s178 = sand.u32 %s26, 1
        %s179 = smul.addr %s178, 8
        %s180 = scalar_lea.vmem [#allocation2], %s179
        // Predicated region
        $region33: #{forward.1} parent=31 // pred_check
          %p181 = pneg %p39
        $region34: #{forward.1} parent=31 // pred_check_branch
          %183 = sbr.rel (%p181) target = $region36
        $region35: #{forward.1} parent=31 // pred_region
          %185 = dma.done %s177, 128
        $region36: #{forward.1} parent=31 // pred_fallthru
          _
        // Predicated region
        $region37: #{forward.1} parent=31 // pred_check
          %p186 = pneg %p60
        $region38: #{forward.1} parent=31 // pred_check_branch
          %188 = sbr.rel (%p186) target = $region40
        $region39: #{forward.1} parent=31 // pred_region
          %190 = dma.done [#allocation5], 16
        $region40: #{forward.1} parent=31 // pred_fallthru
          _
        // Predicated region
        $region41: #{forward.1} parent=31 // pred_check
          %p191 = pneg %p81
        $region42: #{forward.1} parent=31 // pred_check_branch
          %193 = sbr.rel (%p191) target = $region44
        $region43: #{forward.1} parent=31 // pred_region
          %195 = dma.done [#allocation5], 128
        $region44: #{forward.1} parent=31 // pred_fallthru
          _
        %s196 = sand.u32 %s26, 1
        %s197 = scalar_lea.sflag [#allocation3], %s196
        %s198 = sand.u32 %s26, 1
        %s199 = smul.addr %s198, 8
        %s200 = scalar_lea.vmem [#allocation2], %s199
        %p201 = pneg %p39
        %p202 = pneg %p36
        %p203 = pneg %p60
        %p204 = pneg %p57
        %p205 = pneg %p81
        %p206 = pneg %p78
        %p207 = pneg %p107
        %p208 = pneg %p104
        %p209 = scmp.lt.s32.totalorder %s18, 1
        %s210 = scalar_select %p209, %s18, 1
        %s211 = smul.addr %s210, 2
        %s212 = smul.addr %s211, 8
        %s213 = scalar_lea.vmem %s3, %s212
        %p214 = scmp.lt.s32.totalorder %s18, 1
        %s215 = scalar_select %p214, %s18, 1
        %s216 = smul.addr %s215, 2
        %s217 = smul.addr %s216, 8
        %s218 = scalar_lea.vmem %s3, %s217
        %v219 = vld [vmem:[#allocation4] sm:$0x1]
        %220 = vst [vmem:[%s218] sm:$0x1] %v219
        %v221 = vld [vmem:[%s180] sm:$0xff]
        %v222 = vld [vmem:[#allocation6] sm:$0xff]
        %v223 = vadd.f32 %v221, %v222
        %224 = vst [vmem:[%s218 + $0x1] sm:$0xff] %v223
        %p225 = scmp.lt.s32.totalorder %s18, 1
        %s226 = scalar_select %p225, %s18, 1
        %s227 = smul.addr %s226, 2
        %s228 = smul.addr %s227, 8
        %s229 = scalar_lea.vmem %s3, %s228
        // Predicated region
        $region45: #{forward.1} parent=31 // pred_check
          %p230 = pneg %p104
        $region46: #{forward.1} parent=31 // pred_check_branch
          %232 = sbr.rel (%p230) target = $region48
        $region47: #{forward.1} parent=31 // pred_region
          _
        $region48: #{forward.1} parent=31 // pred_fallthru
          _
      $region32: #{forward.1} parent=5 // pred_fallthru
        _
      %p233 = scmp.le.s32.totalorder 2, %s13
      // Predicated region
      $region49: #{forward.1} parent=5 // pred_check
        %p234 = pneg %p233
      $region50: #{forward.1} parent=5 // pred_check_branch
        %236 = sbr.rel (%p234) target = $region52
      $region51: #{forward.1} parent=5 // pred_region
        %s237 = ssub.s32 %s13, 2
        // Predicated region
        $region53: #{forward.1} parent=51 // pred_check
          %p238 = pneg %p110
        $region54: #{forward.1} parent=51 // pred_check_branch
          %240 = sbr.rel (%p238) target = $region56
        $region55: #{forward.1} parent=51 // pred_region
          %p241 = scmp.lt.s32.totalorder %s19, 1
          %s242 = scalar_select %p241, %s19, 1
          %s243 = smul.addr %s242, 2
          %s244 = smul.addr %s243, 8
          %s245 = scalar_lea.vmem %s3, %s244
        $region56: #{forward.1} parent=51 // pred_fallthru
          _
      $region52: #{forward.1} parent=5 // pred_fallthru
        _
    $region6: #{forward.1} parent=1 // loop_footer
      %s17 = sadd.s32 1, %s13
    $region7: #{forward.1} parent=1 // loop_footer_branch
      %12 = sbr.rel target = $region3
    $region8: #{forward.1} parent=1 // loop_exit
      _
    %246 = vsyncpa [#allocation3], 1
    %s247 = scalar_lea.sflag [#allocation3], 1
    %248 = vsyncpa %s247, 1
    %249 = vsyncpa [#allocation5], 1

</llo_original>
